<compile_context>
chip_gen: v6e
topology: v6e:2x2x1
jax: 0.10.0
libtpu: 0.0.40
codegen_flags: <defaults>
</compile_context>

<pallas_src>
import functools

import jax
import jax.numpy as jnp
from jax.experimental import pallas as pl
from jax.experimental.pallas import tpu as pltpu

NCLS_PAD = 128  # lane-dense padded width for the fc output


# ----------------------------------------------------------------------------
# Fused kernel
# ----------------------------------------------------------------------------
def _tcn_fused_kernel(x_ref, w0_ref, b0_ref, wblk_ref, bblk_ref, wfc_ref,
                      bfc_ref, o_ref, *, kernel_size, num_layers):
    T = x_ref.shape[1]
    C = w0_ref.shape[1]

    x = x_ref[0].astype(jnp.float32)  # (T, F); no-op cast when input is f32

    # Initial 1x1 causal conv == pointwise matmul over the frequency axis.
    h = (jnp.dot(x, w0_ref[...].astype(jnp.float32),
                 preferred_element_type=jnp.float32)
         + b0_ref[...])                                     # (T, C)

    # Row (time) index, used to zero the rows that wrap around after a roll.
    t_idx = jax.lax.broadcasted_iota(jnp.int32, (T, C), 0)

    def causal_conv(a, w_flat, bias, dilation):
        # a: (T, C) f32; w_flat: (K*C, C) bf16; bias: (1, C) f32
        # out[t] = sum_j a[t - (K-1-j)*d] @ W[j] + b   (zeros for t < shift)
        taps = []
        for j in range(kernel_size):
            s = (kernel_size - 1 - j) * dilation
            if s == 0:
                taps.append(a)
            else:
                rolled = pltpu.roll(a, shift=s, axis=0)      # rolled[t] = a[t-s]
                taps.append(jnp.where(t_idx >= s, rolled, 0.0))
        stacked = taps[0] if kernel_size == 1 else jnp.concatenate(taps, axis=-1)
        return (jnp.dot(stacked, w_flat.astype(jnp.float32),
                        preferred_element_type=jnp.float32) + bias)

    for l in range(num_layers):
        d = 2 ** l
        res = h
        h = jnp.maximum(causal_conv(h, wblk_ref[l, 0], bblk_ref[l, 0], d), 0.0)
        # TODO(synk): Dropout is identity in eval mode; training-mode dropout not implemented.
        h = jnp.maximum(causal_conv(h, wblk_ref[l, 1], bblk_ref[l, 1], d), 0.0)
        # Every TemporalBlock here has in_channels == out_channels, so the
        # residual downsample is the identity (matches the PyTorch module).
        h = jnp.maximum(h + res, 0.0)

    # fc over channels; output lane-padded to NCLS_PAD for dense stores.
    y = (jnp.dot(h, wfc_ref[...].astype(jnp.float32),
                 preferred_element_type=jnp.float32) + bfc_ref[...])
    o_ref[0] = y.astype(o_ref.dtype)


# ----------------------------------------------------------------------------
# pallas_call wrapper
# ----------------------------------------------------------------------------
def tcn_forward(params, x):
    """Pallas TCN forward. x: (B, 1, num_freqbins, T) -> (B, num_classes, T)."""
    x = jnp.squeeze(x, axis=1)           # (B, F, T)   (torch.squeeze(x, dim=1))
    x = jnp.transpose(x, (0, 2, 1))      # (B, T, F)   kernel layout
    B, T, F = x.shape
    C = params["w0"].shape[1]
    K = int(params["kernel_size"])
    L = int(params["wblk"].shape[0])
    ncls = int(params["num_classes"])

    kern = functools.partial(_tcn_fused_kernel, kernel_size=K, num_layers=L)
    y = pl.pallas_call(
        kern,
        out_shape=jax.ShapeDtypeStruct((B, T, NCLS_PAD), x.dtype),
        grid=(B,),
        in_specs=[
            pl.BlockSpec((1, T, F), lambda i: (i, 0, 0)),          # activations
            pl.BlockSpec((F, C), lambda i: (0, 0)),                # w0
            pl.BlockSpec((1, C), lambda i: (0, 0)),                # b0
            pl.BlockSpec((L, 2, K * C, C), lambda i: (0, 0, 0, 0)),  # block weights
            pl.BlockSpec((L, 2, 1, C), lambda i: (0, 0, 0, 0)),      # block biases
            pl.BlockSpec((C, NCLS_PAD), lambda i: (0, 0)),           # fc weight (padded)
            pl.BlockSpec((1, NCLS_PAD), lambda i: (0, 0)),           # fc bias (padded)
        ],
        out_specs=pl.BlockSpec((1, T, NCLS_PAD), lambda i: (i, 0, 0)),
        compiler_params=pltpu.CompilerParams(dimension_semantics=("parallel",)),
    )(x, params["w0"], params["b0_2d"], params["wblk"], params["bblk"],
      params["wfc_pad"], params["bfc_pad"])

    y = y[:, :, :ncls]                   # drop lane padding
    return jnp.transpose(y, (0, 2, 1))   # (B, num_classes, T)


# ----------------------------------------------------------------------------
# Pure-JAX reference (correctness check), torch NCT layout
# ----------------------------------------------------------------------------
def _causal_conv1d_ref(x_bct, w_oik, b, dilation):
    K = w_oik.shape[2]
    leftpad = (K - 1) * dilation
    xp = jnp.pad(x_bct, ((0, 0), (0, 0), (leftpad, 0)))
    out = jax.lax.conv_general_dilated(
        xp, w_oik, window_strides=(1,), padding="VALID",
        rhs_dilation=(dilation,), dimension_numbers=("NCH", "OIH", "NCH"),
    )
    return out + b[None, :, None]


def tcn_reference(params, x):
    x = jnp.squeeze(x, axis=1)
    x = _causal_conv1d_ref(x, params["w0_torch"], params["b0"], 1)
    for ind, blk in enumerate(params["blocks"]):
        d = 2 ** ind
        h = jax.nn.relu(_causal_conv1d_ref(x, blk["w1"], blk["b1"], d))
        h = jax.nn.relu(_causal_conv1d_ref(h, blk["w2"], blk["b2"], d))
        x = jax.nn.relu(h + x)
    y = jnp.transpose(x, (0, 2, 1)) @ params["wfc_torch"].T + params["bfc"]
    return jnp.transpose(y, (0, 2, 1))


# ----------------------------------------------------------------------------
# Deterministic parameter init (synthetic — no checkpoint loading)
# ----------------------------------------------------------------------------
def _bf16_round(w):
    # Kernel stores weights in bf16; round the reference copy identically so
    # both paths use the exact same effective weights.
    return w.astype(jnp.bfloat16).astype(jnp.float32)


def init_params(key, num_freqbins, out_channels, num_classes, num_layers,
                kernel_size):
    keys = iter(jax.random.split(key, 4 + 6 * num_layers))

    def nrm(shape, scale):
        return scale * jax.random.normal(next(keys), shape, jnp.float32)

    def weight_norm_eff(v, g):
        # torch.nn.utils.weight_norm: w = g * v / ||v||, norm over (in, k) per out-ch
        norm = jnp.sqrt(jnp.sum(v * v, axis=(1, 2), keepdims=True))
        return g[:, None, None] * v / norm

    C, F, K = out_channels, num_freqbins, kernel_size
    params = {"kernel_size": kernel_size, "num_classes": num_classes}

    # initial 1x1 causal conv (torch weight layout: (C, F, 1))
    w0 = _bf16_round(nrm((C, F, 1), 0.1))
    params["w0_torch"] = w0
    params["w0"] = jnp.transpose(w0[:, :, 0], (1, 0)).astype(jnp.bfloat16)  # (F, C)
    b0 = nrm((C,), 0.1)
    params["b0"] = b0
    params["b0_2d"] = b0.reshape(1, C)

    blocks, wstk, bstk = [], [], []
    for _ in range(num_layers):
        blk, ws, bs = {}, [], []
        for name in ("1", "2"):
            v = nrm((C, C, K), 0.01)                       # (Cout, Cin, K)
            g = 1.0 + 0.1 * jax.random.normal(next(keys), (C,), jnp.float32)
            w = _bf16_round(weight_norm_eff(v, g))
            b = nrm((C,), 0.01)
            blk["w" + name] = w                            # torch layout
            blk["b" + name] = b
            ws.append(jnp.transpose(w, (2, 1, 0)).reshape(K * C, C))  # folded taps
            bs.append(b.reshape(1, C))
        blocks.append(blk)
        wstk.append(jnp.stack(ws))
        bstk.append(jnp.stack(bs))
    params["blocks"] = blocks
    params["wblk"] = jnp.stack(wstk).astype(jnp.bfloat16)  # (L, 2, K*C, C)
    params["bblk"] = jnp.stack(bstk)                       # (L, 2, 1, C)

    # fc: torch Linear weight (num_classes, C); pad to NCLS_PAD lanes
    wfc = _bf16_round(nrm((num_classes, C), 0.1))
    bfc = nrm((num_classes,), 0.1)
    params["wfc_torch"] = wfc
    params["bfc"] = bfc
    params["wfc_pad"] = (jnp.zeros((C, NCLS_PAD), jnp.float32)
                         .at[:, :num_classes].set(wfc.T).astype(jnp.bfloat16))
    params["bfc_pad"] = (jnp.zeros((1, NCLS_PAD), jnp.float32)
                         .at[0, :num_classes].set(bfc))
    return params


# ----------------------------------------------------------------------------
if __name__ == "__main__":
    B = 2
    num_input_channels = 1
    num_freqbins = 12
    T = 16
    num_classes = 5
    out_channels = 32
    num_layers = 2
    kernel_size = 2

    key = jax.random.PRNGKey(0)
    k_params, k_x = jax.random.split(key)
    params = init_params(k_params, num_freqbins, out_channels, num_classes,
                         num_layers, kernel_size)

    x = jax.random.normal(k_x, (B, num_input_channels, num_freqbins, T),
                          jnp.float32)

    out = jax.block_until_ready(tcn_forward(params, x))
    assert out.shape == (B, num_classes, T), out.shape

    ref = jax.block_until_ready(tcn_reference(params, x))
    assert jnp.allclose(out, ref, rtol=1e-4, atol=1e-4), \
        float(jnp.max(jnp.abs(out - ref)))

    print("KERNEL_OK")
</pallas_src>

<mosaic_0001>
module attributes {stable_mosaic.version = 11 : i64} {
  func.func @_tcn_fused_kernel(%arg0: i32, %arg1: memref<1x16x12xf32, #tpu.memory_space<vmem>>, %arg2: memref<12x32xbf16, #tpu.memory_space<vmem>>, %arg3: memref<1x32xf32, #tpu.memory_space<vmem>>, %arg4: memref<2x2x64x32xbf16, #tpu.memory_space<vmem>>, %arg5: memref<2x2x1x32xf32, #tpu.memory_space<vmem>>, %arg6: memref<32x128xbf16, #tpu.memory_space<vmem>>, %arg7: memref<1x128xf32, #tpu.memory_space<vmem>>, %arg8: memref<1x16x128xf32, #tpu.memory_space<vmem>>) attributes {dimension_semantics = [#tpu.dimension_semantics<parallel>], iteration_bounds = array<i64: 2>, scalar_prefetch = 0 : i64, scratch_operands = 0 : i64, tpu.core_type = #tpu.core_type<tc>, window_params = [{transform_indices = @transform_0, window_bounds = array<i64: 1, 16, 12>}, {pipeline_mode = #tpu.pipeline_mode<synchronous>, transform_indices = @transform_1, window_bounds = array<i64: 12, 32>}, {pipeline_mode = #tpu.pipeline_mode<synchronous>, transform_indices = @transform_2, window_bounds = array<i64: 1, 32>}, {pipeline_mode = #tpu.pipeline_mode<synchronous>, transform_indices = @transform_3, window_bounds = array<i64: 2, 2, 64, 32>}, {pipeline_mode = #tpu.pipeline_mode<synchronous>, transform_indices = @transform_4, window_bounds = array<i64: 2, 2, 1, 32>}, {pipeline_mode = #tpu.pipeline_mode<synchronous>, transform_indices = @transform_5, window_bounds = array<i64: 32, 128>}, {pipeline_mode = #tpu.pipeline_mode<synchronous>, transform_indices = @transform_6, window_bounds = array<i64: 1, 128>}, {transform_indices = @transform_7, window_bounds = array<i64: 1, 16, 128>}]} {
    %c0 = arith.constant 0 : index
    %c0_0 = arith.constant 0 : index
    %c0_1 = arith.constant 0 : index
    %0 = vector.load %arg1[%c0, %c0_0, %c0_1] : memref<1x16x12xf32, #tpu.memory_space<vmem>>, vector<1x16x12xf32>
    %1 = vector.shape_cast %0 : vector<1x16x12xf32> to vector<16x12xf32>
    %c0_2 = arith.constant 0 : index
    %c0_3 = arith.constant 0 : index
    %2 = vector.load %arg2[%c0_2, %c0_3] : memref<12x32xbf16, #tpu.memory_space<vmem>>, vector<12x32xbf16>
    %3 = arith.extf %2 : vector<12x32xbf16> to vector<12x32xf32>
    %cst = arith.constant dense<0.000000e+00> : vector<16x32xf32>
    %4 = tpu.matmul %1, %3, %cst {dimension_numbers = #tpu.dot_dimension_numbers<[1], [0], [0], [1], [0, 0, 1, 1], [], []>} : vector<16x12xf32>, vector<12x32xf32>, vector<16x32xf32> -> vector<16x32xf32>
    %c0_4 = arith.constant 0 : index
    %c0_5 = arith.constant 0 : index
    %5 = vector.load %arg3[%c0_4, %c0_5] : memref<1x32xf32, #tpu.memory_space<vmem>>, vector<1x32xf32>
    %6 = vector.broadcast %5 : vector<1x32xf32> to vector<16x32xf32>
    %7 = arith.addf %4, %6 : vector<16x32xf32>
    %8 = tpu.iota {dimensions = array<i32: 0>} : vector<16x32xi32>
    %c0_6 = arith.constant 0 : index
    %c0_7 = arith.constant 0 : index
    %c0_8 = arith.constant 0 : index
    %c0_9 = arith.constant 0 : index
    %9 = vector.load %arg4[%c0_6, %c0_7, %c0_8, %c0_9] : memref<2x2x64x32xbf16, #tpu.memory_space<vmem>>, vector<1x1x64x32xbf16>
    %10 = vector.shape_cast %9 : vector<1x1x64x32xbf16> to vector<64x32xbf16>
    %c0_10 = arith.constant 0 : index
    %c0_11 = arith.constant 0 : index
    %c0_12 = arith.constant 0 : index
    %c0_13 = arith.constant 0 : index
    %11 = vector.load %arg5[%c0_10, %c0_11, %c0_12, %c0_13] : memref<2x2x1x32xf32, #tpu.memory_space<vmem>>, vector<1x1x1x32xf32>
    %12 = vector.shape_cast %11 : vector<1x1x1x32xf32> to vector<1x32xf32>
    %c1_i32 = arith.constant 1 : i32
    %13 = tpu.dynamic_rotate %7 by %c1_i32 dim 0 : vector<16x32xf32>, i32 -> vector<16x32xf32>
    %c1_i32_14 = arith.constant 1 : i32
    %14 = vector.broadcast %c1_i32_14 : i32 to vector<16x32xi32>
    %15 = arith.cmpi sge, %8, %14 : vector<16x32xi32>
    %cst_15 = arith.constant 0.000000e+00 : f32
    %16 = vector.broadcast %cst_15 : f32 to vector<16x32xf32>
    %17 = arith.select %15, %13, %16 : vector<16x32xi1>, vector<16x32xf32>
    %18 = tpu.concatenate %17, %7 in 1 : vector<16x32xf32>, vector<16x32xf32> -> vector<16x64xf32>
    %19 = arith.extf %10 : vector<64x32xbf16> to vector<64x32xf32>
    %cst_16 = arith.constant dense<0.000000e+00> : vector<16x32xf32>
    %20 = tpu.matmul %18, %19, %cst_16 {dimension_numbers = #tpu.dot_dimension_numbers<[1], [0], [0], [1], [0, 0, 1, 1], [], []>} : vector<16x64xf32>, vector<64x32xf32>, vector<16x32xf32> -> vector<16x32xf32>
    %21 = vector.broadcast %12 : vector<1x32xf32> to vector<16x32xf32>
    %22 = arith.addf %20, %21 : vector<16x32xf32>
    %cst_17 = arith.constant 0.000000e+00 : f32
    %23 = vector.broadcast %cst_17 : f32 to vector<16x32xf32>
    %24 = arith.maximumf %22, %23 : vector<16x32xf32>
    %c0_18 = arith.constant 0 : index
    %c1 = arith.constant 1 : index
    %c0_19 = arith.constant 0 : index
    %c0_20 = arith.constant 0 : index
    %25 = vector.load %arg4[%c0_18, %c1, %c0_19, %c0_20] : memref<2x2x64x32xbf16, #tpu.memory_space<vmem>>, vector<1x1x64x32xbf16>
    %26 = vector.shape_cast %25 : vector<1x1x64x32xbf16> to vector<64x32xbf16>
    %c0_21 = arith.constant 0 : index
    %c1_22 = arith.constant 1 : index
    %c0_23 = arith.constant 0 : index
    %c0_24 = arith.constant 0 : index
    %27 = vector.load %arg5[%c0_21, %c1_22, %c0_23, %c0_24] : memref<2x2x1x32xf32, #tpu.memory_space<vmem>>, vector<1x1x1x32xf32>
    %28 = vector.shape_cast %27 : vector<1x1x1x32xf32> to vector<1x32xf32>
    %c1_i32_25 = arith.constant 1 : i32
    %29 = tpu.dynamic_rotate %24 by %c1_i32_25 dim 0 : vector<16x32xf32>, i32 -> vector<16x32xf32>
    %c1_i32_26 = arith.constant 1 : i32
    %30 = vector.broadcast %c1_i32_26 : i32 to vector<16x32xi32>
    %31 = arith.cmpi sge, %8, %30 : vector<16x32xi32>
    %cst_27 = arith.constant 0.000000e+00 : f32
    %32 = vector.broadcast %cst_27 : f32 to vector<16x32xf32>
    %33 = arith.select %31, %29, %32 : vector<16x32xi1>, vector<16x32xf32>
    %34 = tpu.concatenate %33, %24 in 1 : vector<16x32xf32>, vector<16x32xf32> -> vector<16x64xf32>
    %35 = arith.extf %26 : vector<64x32xbf16> to vector<64x32xf32>
    %cst_28 = arith.constant dense<0.000000e+00> : vector<16x32xf32>
    %36 = tpu.matmul %34, %35, %cst_28 {dimension_numbers = #tpu.dot_dimension_numbers<[1], [0], [0], [1], [0, 0, 1, 1], [], []>} : vector<16x64xf32>, vector<64x32xf32>, vector<16x32xf32> -> vector<16x32xf32>
    %37 = vector.broadcast %28 : vector<1x32xf32> to vector<16x32xf32>
    %38 = arith.addf %36, %37 : vector<16x32xf32>
    %cst_29 = arith.constant 0.000000e+00 : f32
    %39 = vector.broadcast %cst_29 : f32 to vector<16x32xf32>
    %40 = arith.maximumf %38, %39 : vector<16x32xf32>
    %41 = arith.addf %40, %7 : vector<16x32xf32>
    %cst_30 = arith.constant 0.000000e+00 : f32
    %42 = vector.broadcast %cst_30 : f32 to vector<16x32xf32>
    %43 = arith.maximumf %41, %42 : vector<16x32xf32>
    %c1_31 = arith.constant 1 : index
    %c0_32 = arith.constant 0 : index
    %c0_33 = arith.constant 0 : index
    %c0_34 = arith.constant 0 : index
    %44 = vector.load %arg4[%c1_31, %c0_32, %c0_33, %c0_34] : memref<2x2x64x32xbf16, #tpu.memory_space<vmem>>, vector<1x1x64x32xbf16>
    %45 = vector.shape_cast %44 : vector<1x1x64x32xbf16> to vector<64x32xbf16>
    %c1_35 = arith.constant 1 : index
    %c0_36 = arith.constant 0 : index
    %c0_37 = arith.constant 0 : index
    %c0_38 = arith.constant 0 : index
    %46 = vector.load %arg5[%c1_35, %c0_36, %c0_37, %c0_38] : memref<2x2x1x32xf32, #tpu.memory_space<vmem>>, vector<1x1x1x32xf32>
    %47 = vector.shape_cast %46 : vector<1x1x1x32xf32> to vector<1x32xf32>
    %c2_i32 = arith.constant 2 : i32
    %48 = tpu.dynamic_rotate %43 by %c2_i32 dim 0 : vector<16x32xf32>, i32 -> vector<16x32xf32>
    %c2_i32_39 = arith.constant 2 : i32
    %49 = vector.broadcast %c2_i32_39 : i32 to vector<16x32xi32>
    %50 = arith.cmpi sge, %8, %49 : vector<16x32xi32>
    %cst_40 = arith.constant 0.000000e+00 : f32
    %51 = vector.broadcast %cst_40 : f32 to vector<16x32xf32>
    %52 = arith.select %50, %48, %51 : vector<16x32xi1>, vector<16x32xf32>
    %53 = tpu.concatenate %52, %43 in 1 : vector<16x32xf32>, vector<16x32xf32> -> vector<16x64xf32>
    %54 = arith.extf %45 : vector<64x32xbf16> to vector<64x32xf32>
    %cst_41 = arith.constant dense<0.000000e+00> : vector<16x32xf32>
    %55 = tpu.matmul %53, %54, %cst_41 {dimension_numbers = #tpu.dot_dimension_numbers<[1], [0], [0], [1], [0, 0, 1, 1], [], []>} : vector<16x64xf32>, vector<64x32xf32>, vector<16x32xf32> -> vector<16x32xf32>
    %56 = vector.broadcast %47 : vector<1x32xf32> to vector<16x32xf32>
    %57 = arith.addf %55, %56 : vector<16x32xf32>
    %cst_42 = arith.constant 0.000000e+00 : f32
    %58 = vector.broadcast %cst_42 : f32 to vector<16x32xf32>
    %59 = arith.maximumf %57, %58 : vector<16x32xf32>
    %c1_43 = arith.constant 1 : index
    %c1_44 = arith.constant 1 : index
    %c0_45 = arith.constant 0 : index
    %c0_46 = arith.constant 0 : index
    %60 = vector.load %arg4[%c1_43, %c1_44, %c0_45, %c0_46] : memref<2x2x64x32xbf16, #tpu.memory_space<vmem>>, vector<1x1x64x32xbf16>
    %61 = vector.shape_cast %60 : vector<1x1x64x32xbf16> to vector<64x32xbf16>
    %c1_47 = arith.constant 1 : index
    %c1_48 = arith.constant 1 : index
    %c0_49 = arith.constant 0 : index
    %c0_50 = arith.constant 0 : index
    %62 = vector.load %arg5[%c1_47, %c1_48, %c0_49, %c0_50] : memref<2x2x1x32xf32, #tpu.memory_space<vmem>>, vector<1x1x1x32xf32>
    %63 = vector.shape_cast %62 : vector<1x1x1x32xf32> to vector<1x32xf32>
    %c2_i32_51 = arith.constant 2 : i32
    %64 = tpu.dynamic_rotate %59 by %c2_i32_51 dim 0 : vector<16x32xf32>, i32 -> vector<16x32xf32>
    %c2_i32_52 = arith.constant 2 : i32
    %65 = vector.broadcast %c2_i32_52 : i32 to vector<16x32xi32>
    %66 = arith.cmpi sge, %8, %65 : vector<16x32xi32>
    %cst_53 = arith.constant 0.000000e+00 : f32
    %67 = vector.broadcast %cst_53 : f32 to vector<16x32xf32>
    %68 = arith.select %66, %64, %67 : vector<16x32xi1>, vector<16x32xf32>
    %69 = tpu.concatenate %68, %59 in 1 : vector<16x32xf32>, vector<16x32xf32> -> vector<16x64xf32>
    %70 = arith.extf %61 : vector<64x32xbf16> to vector<64x32xf32>
    %cst_54 = arith.constant dense<0.000000e+00> : vector<16x32xf32>
    %71 = tpu.matmul %69, %70, %cst_54 {dimension_numbers = #tpu.dot_dimension_numbers<[1], [0], [0], [1], [0, 0, 1, 1], [], []>} : vector<16x64xf32>, vector<64x32xf32>, vector<16x32xf32> -> vector<16x32xf32>
    %72 = vector.broadcast %63 : vector<1x32xf32> to vector<16x32xf32>
    %73 = arith.addf %71, %72 : vector<16x32xf32>
    %cst_55 = arith.constant 0.000000e+00 : f32
    %74 = vector.broadcast %cst_55 : f32 to vector<16x32xf32>
    %75 = arith.maximumf %73, %74 : vector<16x32xf32>
    %76 = arith.addf %75, %43 : vector<16x32xf32>
    %cst_56 = arith.constant 0.000000e+00 : f32
    %77 = vector.broadcast %cst_56 : f32 to vector<16x32xf32>
    %78 = arith.maximumf %76, %77 : vector<16x32xf32>
    %c0_57 = arith.constant 0 : index
    %c0_58 = arith.constant 0 : index
    %79 = vector.load %arg6[%c0_57, %c0_58] : memref<32x128xbf16, #tpu.memory_space<vmem>>, vector<32x128xbf16>
    %80 = arith.extf %79 : vector<32x128xbf16> to vector<32x128xf32>
    %cst_59 = arith.constant dense<0.000000e+00> : vector<16x128xf32>
    %81 = tpu.matmul %78, %80, %cst_59 {dimension_numbers = #tpu.dot_dimension_numbers<[1], [0], [0], [1], [0, 0, 1, 1], [], []>} : vector<16x32xf32>, vector<32x128xf32>, vector<16x128xf32> -> vector<16x128xf32>
    %c0_60 = arith.constant 0 : index
    %c0_61 = arith.constant 0 : index
    %82 = vector.load %arg7[%c0_60, %c0_61] : memref<1x128xf32, #tpu.memory_space<vmem>>, vector<1x128xf32>
    %83 = vector.broadcast %82 : vector<1x128xf32> to vector<16x128xf32>
    %84 = arith.addf %81, %83 : vector<16x128xf32>
    %c0_62 = arith.constant 0 : index
    %c0_63 = arith.constant 0 : index
    %c0_64 = arith.constant 0 : index
    %85 = vector.load %arg8[%c0_62, %c0_63, %c0_64] : memref<1x16x128xf32, #tpu.memory_space<vmem>>, vector<1x16x128xf32>
    %86 = vector.shape_cast %85 : vector<1x16x128xf32> to vector<16x128xf32>
    %87 = vector.shape_cast %84 : vector<16x128xf32> to vector<1x16x128xf32>
    tpu.vector_store %arg8[%c0_62, %c0_63, %c0_64], %87 {strides = array<i32>} : memref<1x16x128xf32, #tpu.memory_space<vmem>>, vector<1x16x128xf32>,
    return
  }
  func.func @transform_0(%arg0: i32) -> (i32, i32, i32) {
    %c0_i32 = arith.constant 0 : i32
    %c0_i32_0 = arith.constant 0 : i32
    %c0_i32_1 = arith.constant 0 : i32
    return %arg0, %c0_i32, %c0_i32_0 : i32, i32, i32
  }
  func.func @transform_1(%arg0: i32) -> (i32, i32) {
    %c0_i32 = arith.constant 0 : i32
    %c0_i32_0 = arith.constant 0 : i32
    %c0_i32_1 = arith.constant 0 : i32
    return %c0_i32, %c0_i32_0 : i32, i32
  }
  func.func @transform_2(%arg0: i32) -> (i32, i32) {
    %c0_i32 = arith.constant 0 : i32
    %c0_i32_0 = arith.constant 0 : i32
    %c0_i32_1 = arith.constant 0 : i32
    return %c0_i32, %c0_i32_0 : i32, i32
  }
  func.func @transform_3(%arg0: i32) -> (i32, i32, i32, i32) {
    %c0_i32 = arith.constant 0 : i32
    %c0_i32_0 = arith.constant 0 : i32
    %c0_i32_1 = arith.constant 0 : i32
    %c0_i32_2 = arith.constant 0 : i32
    %c0_i32_3 = arith.constant 0 : i32
    return %c0_i32, %c0_i32_0, %c0_i32_1, %c0_i32_2 : i32, i32, i32, i32
  }
  func.func @transform_4(%arg0: i32) -> (i32, i32, i32, i32) {
    %c0_i32 = arith.constant 0 : i32
    %c0_i32_0 = arith.constant 0 : i32
    %c0_i32_1 = arith.constant 0 : i32
    %c0_i32_2 = arith.constant 0 : i32
    %c0_i32_3 = arith.constant 0 : i32
    return %c0_i32, %c0_i32_0, %c0_i32_1, %c0_i32_2 : i32, i32, i32, i32
  }
  func.func @transform_5(%arg0: i32) -> (i32, i32) {
    %c0_i32 = arith.constant 0 : i32
    %c0_i32_0 = arith.constant 0 : i32
    %c0_i32_1 = arith.constant 0 : i32
    return %c0_i32, %c0_i32_0 : i32, i32
  }
  func.func @transform_6(%arg0: i32) -> (i32, i32) {
    %c0_i32 = arith.constant 0 : i32
    %c0_i32_0 = arith.constant 0 : i32
    %c0_i32_1 = arith.constant 0 : i32
    return %c0_i32, %c0_i32_0 : i32, i32
  }
  func.func @transform_7(%arg0: i32) -> (i32, i32, i32) {
    %c0_i32 = arith.constant 0 : i32
    %c0_i32_0 = arith.constant 0 : i32
    %c0_i32_1 = arith.constant 0 : i32
    return %arg0, %c0_i32, %c0_i32_0 : i32, i32, i32
  }
}

</mosaic_0001>

<llo_original>
// kernel: tpu_custom_call.1
$region0: #{tpu_custom_call.1}
  #allocation0 [shape = 'u32[]', space=smem, size = 0x4, offset = 0x4, fixed_abs, tag = 'smem constant byte address 0x4 - core index']
  #allocation1 [shape = 'u32[144,128]{1,0:T(1,128)}', space=vmem, size = 0x12000, scoped, tag = 'internal scratch']
  %s0 = inlined_call_operand.vmem [shape: f32[2,16,12], index: 0, kind: input, shape index: {}]
  %s1 = inlined_call_operand.vmem [shape: bf16[12,32], index: 1, kind: input, shape index: {}]
  %s2 = inlined_call_operand.vmem [shape: f32[1,32], index: 2, kind: input, shape index: {}]
  %s3 = inlined_call_operand.vmem [shape: bf16[2,2,64,32], index: 3, kind: input, shape index: {}]
  %s4 = inlined_call_operand.vmem [shape: f32[2,2,1,32], index: 4, kind: input, shape index: {}]
  %s5 = inlined_call_operand.vmem [shape: bf16[32,128], index: 5, kind: input, shape index: {}]
  %s6 = inlined_call_operand.vmem [shape: f32[1,128], index: 6, kind: input, shape index: {}]
  %s7 = inlined_call_operand.hbm [shape: f32[2,16,128], index: 7, kind: output, shape index: {}]
  %s8 = sld [smem:[#allocation0]]
  $region61: #{tpu_custom_call.1} parent=0
    _
  %s10 = ssub.s32 1, %s8
  %s11 = scalar_select 0, %s10, %s8
  $region1: #{tpu_custom_call.1} parent=0
    #allocation2 [shape = 'u8[16384]{0}', space=vmem, size = 0x4000, scoped, tag = 'output window, operand 0']
    #allocation3 [shape = 's32[2]{0}', space=sflag, size = 0x8, scoped, tag = 'scoped memory for tpu_custom_call.1']
    %12 = vsyncpa [#allocation3], 0
    %s13 = scalar_lea.sflag [#allocation3], 1
    %14 = vsyncpa %s13, 0
    loop: start=0, step=1, limit=4
    $region2: #{tpu_custom_call.1} parent=1 // loop_pre_header
      _
    $region3: #{tpu_custom_call.1} parent=1 // loop_header
      %s16 = sphi 0, %s20
      %p17 = scmp.ge.s32.totalorder %s16, 4
      %s26 = sphi 0, %s28
      %s29 = sphi 0, %s26
      %s30 = sphi 0, %s29
      %s46 = sphi 0, %s30
      %s50 = sphi 0, %s50
      %s52 = sphi 0, %s50
      %s53 = sphi 0, %s52
      %s67 = sphi 0, %s53
      %s71 = sphi 0, %s71
      %s73 = sphi 0, %s71
      %s74 = sphi 0, %s73
      %s88 = sphi 0, %s74
      %s92 = sphi 0, %s92
      %s94 = sphi 0, %s92
      %s95 = sphi 0, %s94
      %s109 = sphi 0, %s95
      %s113 = sphi 0, %s113
      %s115 = sphi 0, %s113
      %s116 = sphi 0, %s115
      %s130 = sphi 0, %s116
      %s134 = sphi 0, %s134
      %s136 = sphi 0, %s134
      %s137 = sphi 0, %s136
      %s151 = sphi 0, %s137
      %s155 = sphi 0, %s155
      %s157 = sphi 0, %s155
      %s158 = sphi 0, %s157
      %s172 = sphi 0, %s158
      %s178 = sphi 0, %s180
      %s181 = sphi 0, %s178
      %s182 = sphi 0, %s181
      %s198 = sphi 0, %s182
    $region4: #{tpu_custom_call.1} parent=1 // loop_header_branch
      %19 = sbr.rel (%p17) target = $region8
    $region5: #{tpu_custom_call.1} parent=1 // loop_body
      %s21 = ssub.s32 %s16, 1
      %s22 = ssub.s32 %s16, 2
      %s23 = sadd.s32 %s16, 1
      %s24 = ssub.s32 %s16, %s23
      %p25 = scmp.eq.s32.totalorder %s24, 0
      %s27 = sadd.s32 %s26, 1
      %s28 = scalar_select %p25, %s26, %s27
      %p31 = pneg %p25
      %p32 = scmp.eq.s32.totalorder %s16, 1
      %p33 = por %p31, %p32
      %p34 = scmp.ne.s32.totalorder %s26, %s29
      %p35 = scmp.eq.s32.totalorder %s16, 0
      %p36 = por %p34, %p35
      %p37 = scmp.ne.s32.totalorder %s26, %s29
      %p38 = scmp.eq.s32.totalorder %s21, 1
      %p39 = por %p37, %p38
      %p40 = scmp.ne.s32.totalorder %s29, %s30
      %p41 = scmp.eq.s32.totalorder %s21, 0
      %p42 = por %p40, %p41
      %p43 = scmp.ne.s32.totalorder %s29, %s30
      %p44 = scmp.eq.s32.totalorder %s22, 1
      %p45 = por %p43, %p44
      %p47 = scmp.ne.s32.totalorder %s30, %s46
      %p48 = scmp.eq.s32.totalorder %s22, 0
      %p49 = por %p47, %p48
      %s51 = sadd.s32 %s50, 1
      %p54 = scmp.eq.s32.totalorder %s16, 1
      %p55 = scmp.ne.s32.totalorder %s50, %s52
      %p56 = scmp.eq.s32.totalorder %s16, 0
      %p57 = por %p55, %p56
      %p58 = scmp.ne.s32.totalorder %s50, %s52
      %p59 = scmp.eq.s32.totalorder %s21, 1
      %p60 = por %p58, %p59
      %p61 = scmp.ne.s32.totalorder %s52, %s53
      %p62 = scmp.eq.s32.totalorder %s21, 0
      %p63 = por %p61, %p62
      %p64 = scmp.ne.s32.totalorder %s52, %s53
      %p65 = scmp.eq.s32.totalorder %s22, 1
      %p66 = por %p64, %p65
      %p68 = scmp.ne.s32.totalorder %s53, %s67
      %p69 = scmp.eq.s32.totalorder %s22, 0
      %p70 = por %p68, %p69
      %s72 = sadd.s32 %s71, 1
      %p75 = scmp.eq.s32.totalorder %s16, 1
      %p76 = scmp.ne.s32.totalorder %s71, %s73
      %p77 = scmp.eq.s32.totalorder %s16, 0
      %p78 = por %p76, %p77
      %p79 = scmp.ne.s32.totalorder %s71, %s73
      %p80 = scmp.eq.s32.totalorder %s21, 1
      %p81 = por %p79, %p80
      %p82 = scmp.ne.s32.totalorder %s73, %s74
      %p83 = scmp.eq.s32.totalorder %s21, 0
      %p84 = por %p82, %p83
      %p85 = scmp.ne.s32.totalorder %s73, %s74
      %p86 = scmp.eq.s32.totalorder %s22, 1
      %p87 = por %p85, %p86
      %p89 = scmp.ne.s32.totalorder %s74, %s88
      %p90 = scmp.eq.s32.totalorder %s22, 0
      %p91 = por %p89, %p90
      %s93 = sadd.s32 %s92, 1
      %p96 = scmp.eq.s32.totalorder %s16, 1
      %p97 = scmp.ne.s32.totalorder %s92, %s94
      %p98 = scmp.eq.s32.totalorder %s16, 0
      %p99 = por %p97, %p98
      %p100 = scmp.ne.s32.totalorder %s92, %s94
      %p101 = scmp.eq.s32.totalorder %s21, 1
      %p102 = por %p100, %p101
      %p103 = scmp.ne.s32.totalorder %s94, %s95
      %p104 = scmp.eq.s32.totalorder %s21, 0
      %p105 = por %p103, %p104
      %p106 = scmp.ne.s32.totalorder %s94, %s95
      %p107 = scmp.eq.s32.totalorder %s22, 1
      %p108 = por %p106, %p107
      %p110 = scmp.ne.s32.totalorder %s95, %s109
      %p111 = scmp.eq.s32.totalorder %s22, 0
      %p112 = por %p110, %p111
      %s114 = sadd.s32 %s113, 1
      %p117 = scmp.eq.s32.totalorder %s16, 1
      %p118 = scmp.ne.s32.totalorder %s113, %s115
      %p119 = scmp.eq.s32.totalorder %s16, 0
      %p120 = por %p118, %p119
      %p121 = scmp.ne.s32.totalorder %s113, %s115
      %p122 = scmp.eq.s32.totalorder %s21, 1
      %p123 = por %p121, %p122
      %p124 = scmp.ne.s32.totalorder %s115, %s116
      %p125 = scmp.eq.s32.totalorder %s21, 0
      %p126 = por %p124, %p125
      %p127 = scmp.ne.s32.totalorder %s115, %s116
      %p128 = scmp.eq.s32.totalorder %s22, 1
      %p129 = por %p127, %p128
      %p131 = scmp.ne.s32.totalorder %s116, %s130
      %p132 = scmp.eq.s32.totalorder %s22, 0
      %p133 = por %p131, %p132
      %s135 = sadd.s32 %s134, 1
      %p138 = scmp.eq.s32.totalorder %s16, 1
      %p139 = scmp.ne.s32.totalorder %s134, %s136
      %p140 = scmp.eq.s32.totalorder %s16, 0
      %p141 = por %p139, %p140
      %p142 = scmp.ne.s32.totalorder %s134, %s136
      %p143 = scmp.eq.s32.totalorder %s21, 1
      %p144 = por %p142, %p143
      %p145 = scmp.ne.s32.totalorder %s136, %s137
      %p146 = scmp.eq.s32.totalorder %s21, 0
      %p147 = por %p145, %p146
      %p148 = scmp.ne.s32.totalorder %s136, %s137
      %p149 = scmp.eq.s32.totalorder %s22, 1
      %p150 = por %p148, %p149
      %p152 = scmp.ne.s32.totalorder %s137, %s151
      %p153 = scmp.eq.s32.totalorder %s22, 0
      %p154 = por %p152, %p153
      %s156 = sadd.s32 %s155, 1
      %p159 = scmp.eq.s32.totalorder %s16, 1
      %p160 = scmp.ne.s32.totalorder %s155, %s157
      %p161 = scmp.eq.s32.totalorder %s16, 0
      %p162 = por %p160, %p161
      %p163 = scmp.ne.s32.totalorder %s155, %s157
      %p164 = scmp.eq.s32.totalorder %s21, 1
      %p165 = por %p163, %p164
      %p166 = scmp.ne.s32.totalorder %s157, %s158
      %p167 = scmp.eq.s32.totalorder %s21, 0
      %p168 = por %p166, %p167
      %p169 = scmp.ne.s32.totalorder %s157, %s158
      %p170 = scmp.eq.s32.totalorder %s22, 1
      %p171 = por %p169, %p170
      %p173 = scmp.ne.s32.totalorder %s158, %s172
      %p174 = scmp.eq.s32.totalorder %s22, 0
      %p175 = por %p173, %p174
      %s176 = ssub.s32 %s16, %s23
      %p177 = scmp.eq.s32.totalorder %s176, 0
      %s179 = sadd.s32 %s178, 1
      %s180 = scalar_select %p177, %s178, %s179
      %p183 = pneg %p177
      %p184 = scmp.eq.s32.totalorder %s16, 1
      %p185 = por %p183, %p184
      %p186 = scmp.ne.s32.totalorder %s178, %s181
      %p187 = scmp.eq.s32.totalorder %s16, 0
      %p188 = por %p186, %p187
      %p189 = scmp.ne.s32.totalorder %s178, %s181
      %p190 = scmp.eq.s32.totalorder %s21, 1
      %p191 = por %p189, %p190
      %p192 = scmp.ne.s32.totalorder %s181, %s182
      %p193 = scmp.eq.s32.totalorder %s21, 0
      %p194 = por %p192, %p193
      %p195 = scmp.ne.s32.totalorder %s181, %s182
      %p196 = scmp.eq.s32.totalorder %s22, 1
      %p197 = por %p195, %p196
      %p199 = scmp.ne.s32.totalorder %s182, %s198
      %p200 = scmp.eq.s32.totalorder %s22, 0
      %p201 = por %p199, %p200
      %p202 = scmp.le.s32.totalorder 1, %s16
      %p203 = scmp.lt.s32.totalorder %s16, 3
      %p204 = pnand %p202, %p203
      %p205 = pneg %p204
      // Predicated region
      $region9: #{tpu_custom_call.1} parent=5 // pred_check
        _
      $region10: #{tpu_custom_call.1} parent=5 // pred_check_branch
        %207 = sbr.rel (%p204) target = $region12
      $region11: #{tpu_custom_call.1} parent=5 // pred_region
        %s208 = ssub.s32 %s16, 1
        // Predicated region
        $region13: #{tpu_custom_call.1} parent=11 // pred_check
          %p209 = pneg %p63
        $region14: #{tpu_custom_call.1} parent=11 // pred_check_branch
          %211 = sbr.rel (%p209) target = $region16
        $region15: #{tpu_custom_call.1} parent=11 // pred_region
          _
        $region16: #{tpu_custom_call.1} parent=11 // pred_fallthru
          _
        // Predicated region
        $region17: #{tpu_custom_call.1} parent=11 // pred_check
          %p212 = pneg %p84
        $region18: #{tpu_custom_call.1} parent=11 // pred_check_branch
          %214 = sbr.rel (%p212) target = $region20
        $region19: #{tpu_custom_call.1} parent=11 // pred_region
          _
        $region20: #{tpu_custom_call.1} parent=11 // pred_fallthru
          _
        // Predicated region
        $region21: #{tpu_custom_call.1} parent=11 // pred_check
          %p215 = pneg %p105
        $region22: #{tpu_custom_call.1} parent=11 // pred_check_branch
          %217 = sbr.rel (%p215) target = $region24
        $region23: #{tpu_custom_call.1} parent=11 // pred_region
          _
        $region24: #{tpu_custom_call.1} parent=11 // pred_fallthru
          _
        // Predicated region
        $region25: #{tpu_custom_call.1} parent=11 // pred_check
          %p218 = pneg %p126
        $region26: #{tpu_custom_call.1} parent=11 // pred_check_branch
          %220 = sbr.rel (%p218) target = $region28
        $region27: #{tpu_custom_call.1} parent=11 // pred_region
          _
        $region28: #{tpu_custom_call.1} parent=11 // pred_fallthru
          _
        // Predicated region
        $region29: #{tpu_custom_call.1} parent=11 // pred_check
          %p221 = pneg %p147
        $region30: #{tpu_custom_call.1} parent=11 // pred_check_branch
          %223 = sbr.rel (%p221) target = $region32
        $region31: #{tpu_custom_call.1} parent=11 // pred_region
          _
        $region32: #{tpu_custom_call.1} parent=11 // pred_fallthru
          _
        // Predicated region
        $region33: #{tpu_custom_call.1} parent=11 // pred_check
          %p224 = pneg %p168
        $region34: #{tpu_custom_call.1} parent=11 // pred_check_branch
          %226 = sbr.rel (%p224) target = $region36
        $region35: #{tpu_custom_call.1} parent=11 // pred_region
          _
        $region36: #{tpu_custom_call.1} parent=11 // pred_fallthru
          _
      $region12: #{tpu_custom_call.1} parent=5 // pred_fallthru
        _
      %p227 = scmp.lt.s32.totalorder %s16, 2
      // Predicated region
      $region37: #{tpu_custom_call.1} parent=5 // pred_check
        %p228 = pneg %p227
      $region38: #{tpu_custom_call.1} parent=5 // pred_check_branch
        %230 = sbr.rel (%p228) target = $region40
      $region39: #{tpu_custom_call.1} parent=5 // pred_region
        // Predicated region
        $region41: #{tpu_custom_call.1} parent=39 // pred_check
          %p231 = pneg %p36
        $region42: #{tpu_custom_call.1} parent=39 // pred_check_branch
          %233 = sbr.rel (%p231) target = $region44
        $region43: #{tpu_custom_call.1} parent=39 // pred_region
          %p234 = scmp.lt.s32.totalorder %s16, 1
          %s235 = scalar_select %p234, %s16, 1
          %s236 = smul.addr %s235, 2
          %s237 = smul.addr %s236, 8
          %s238 = scalar_lea.vmem %s0, %s237
        $region44: #{tpu_custom_call.1} parent=39 // pred_fallthru
          _
      $region40: #{tpu_custom_call.1} parent=5 // pred_fallthru
        _
      %p239 = scmp.le.s32.totalorder 1, %s16
      %p240 = scmp.lt.s32.totalorder %s16, 3
      %p241 = pnand %p239, %p240
      %p242 = pneg %p241
      // Predicated region
      $region45: #{tpu_custom_call.1} parent=5 // pred_check
        _
      $region46: #{tpu_custom_call.1} parent=5 // pred_check_branch
        %244 = sbr.rel (%p241) target = $region48
      $region47: #{tpu_custom_call.1} parent=5 // pred_region
        %s245 = ssub.s32 %s16, 1
        %p246 = scmp.lt.s32.totalorder %s21, 1
        %s247 = scalar_select %p246, %s21, 1
        %s248 = smul.addr %s247, 2
        %s249 = smul.addr %s248, 8
        %s250 = scalar_lea.vmem %s0, %s249
        %p251 = pneg %p42
        %p252 = pneg %p39
        %p253 = pneg %p63
        %p254 = pneg %p60
        %p255 = pneg %p84
        %p256 = pneg %p81
        %p257 = pneg %p105
        %p258 = pneg %p102
        %p259 = pneg %p126
        %p260 = pneg %p123
        %p261 = pneg %p147
        %p262 = pneg %p144
        %p263 = pneg %p168
        %p264 = pneg %p165
        %p265 = pneg %p194
        %p266 = pneg %p191
        %s267 = sand.u32 %s181, 1
        %s268 = scalar_lea.sflag [#allocation3], %s267
        %s269 = sand.u32 %s181, 1
        %s270 = smul.addr %s269, 16
        %s271 = scalar_lea.vmem [#allocation2], %s270
        %p272 = scmp.lt.s32.totalorder %s21, 1
        %s273 = scalar_select %p272, %s21, 1
        %s274 = smul.addr %s273, 2
        %s275 = smul.addr %s274, 8
        %s276 = scalar_lea.vmem %s0, %s275
        %v277 = vld [vmem:[%s276] sm:$0xff]
        %v278 = vld [vmem:[%s276 + $0x8] sm:$0xff]
        %v279 = vld [vmem:[%s1] sm:$0xf]
        %v280 = vld [vmem:[%s1 + $0x4] sm:$0x3]
        %v281 = vunpack.c.l.bf16 %v279
        %v282 = vunpack.c.l.bf16 %v280
        %v283 = vld [vmem:[%s2] sm:$0x1]
        %v285 = vlaneseq
        %v286 = vshrl.u32 %v285, 7
        %v287 = vsub.s32 0, %v286
        %v288 = vrot.slane %v283, %v287
        %vm290 = vcmask 97280
        %v292 = vsel %vm290, %v277, 0
        %v295 = vsel %vm290, %v278, 0
        %vm297 = vcmask 1043456
        %v299 = vsel %vm297, %v282, 0
        %301 = vmatprep.subr.mxu0 0.0
        %302 = vmatpush1.msra.mxu0 0.0
        %303 = vmatprep.subr.mxu0 0.0
        %304 = vmatpush1.msra.mxu0 0.0
        %305 = vmatprep.subr.mxu0 0.0
        %306 = vmatpush1.msra.mxu0 0.0
        %307 = vmatprep.subr.mxu0 0.0
        %308 = vmatpush1.msra.mxu0 0.0
        %309 = vmatprep.subr.mxu0 0.0
        %310 = vmatpush1.msra.mxu0 0.0
        %311 = vmatprep.subr.mxu0 0.0
        %312 = vmatpush1.msra.mxu0 0.0
        %313 = vmatprep.subr.mxu0 0.0
        %314 = vmatpush1.msra.mxu0 0.0
        %315 = vmatprep.subr.mxu0 0.0
        %316 = vmatpush1.msra.mxu0 0.0
        %317 = vmatprep.subr.mxu0 0.0
        %318 = vmatpush1.msra.mxu0 0.0
        %319 = vmatprep.subr.mxu0 0.0
        %320 = vmatpush1.msra.mxu0 0.0
        %321 = vmatprep.subr.mxu0 0.0
        %322 = vmatpush1.msra.mxu0 0.0
        %323 = vmatprep.subr.mxu0 0.0
        %324 = vmatpush1.msra.mxu0 0.0
        %325 = vmatprep.subr.mxu0 0.0
        %326 = vmatpush1.msra.mxu0 0.0
        %327 = vmatprep.subr.mxu0 0.0
        %328 = vmatpush1.msra.mxu0 0.0
        %329 = vmatprep.subr.mxu0 0.0
        %330 = vmatpush1.msra.mxu0 %v299
        %331 = vmatprep.subr.mxu0 0.0
        %332 = vmatpush1.msra.mxu0 %v281
        %333 = vmatprep.subr.mxu0 0.0
        %334 = vmatpush2.msra.mxu0 0.0
        %335 = vmatprep.subr.mxu0 0.0
        %336 = vmatpush2.msra.mxu0 0.0
        %337 = vmatprep.subr.mxu0 0.0
        %338 = vmatpush2.msra.mxu0 0.0
        %339 = vmatprep.subr.mxu0 0.0
        %340 = vmatpush2.msra.mxu0 0.0
        %341 = vmatprep.subr.mxu0 0.0
        %342 = vmatpush2.msra.mxu0 0.0
        %343 = vmatprep.subr.mxu0 0.0
        %344 = vmatpush2.msra.mxu0 0.0
        %345 = vmatprep.subr.mxu0 0.0
        %346 = vmatpush2.msra.mxu0 0.0
        %347 = vmatprep.subr.mxu0 0.0
        %348 = vmatpush2.msra.mxu0 0.0
        %349 = vmatprep.subr.mxu0 0.0
        %350 = vmatpush2.msra.mxu0 0.0
        %351 = vmatprep.subr.mxu0 0.0
        %352 = vmatpush2.msra.mxu0 0.0
        %353 = vmatprep.subr.mxu0 0.0
        %354 = vmatpush2.msra.mxu0 0.0
        %355 = vmatprep.subr.mxu0 0.0
        %356 = vmatpush2.msra.mxu0 0.0
        %357 = vmatprep.subr.mxu0 0.0
        %358 = vmatpush2.msra.mxu0 0.0
        %359 = vmatprep.subr.mxu0 0.0
        %360 = vmatpush2.msra.mxu0 0.0
        %361 = vmatprep.subr.mxu0 0.0
        %362 = vmatpush2.msra.mxu0 0.0
        %363 = vmatprep.subr.mxu0 0.0
        %364 = vmatpush2.msra.mxu0 0.0
        %365 = vmatprep.mubr.f32.mxu0 0.0
        %366 = vmatmul.mubr.f32.gmra.mxu0 %v292
        %v367 = vpop.f32.mrf.mxu0
        %v368 = vadd.f32 %v288, %v367
        %v369 = vpop.f32.mrf.mxu0
        %370 = vmatprep.mubr.f32.mxu0 0.0
        %371 = vmatmul.mubr.f32.gmra.mxu0 %v295
        %v372 = vpop.f32.mrf.mxu0
        %v373 = vadd.f32 %v288, %v372
        %v374 = vpop.f32.mrf.mxu0
        %375 = vdwg.mxu0
        %v376 = vlaneseq
        %v377 = vshrl.u32 %v376, 7
        %v378 = vadd.s32 %v377, 8
        %v379 = vld [vmem:[%s3] sm:$0xf]
        %v380 = vld [vmem:[%s3 + $0x4] sm:$0xf]
        %v381 = vld [vmem:[%s3 + $0x8] sm:$0xf]
        %v382 = vld [vmem:[%s3 + $0xc] sm:$0xf]
        %v383 = vld [vmem:[%s3 + $0x10] sm:$0xf]
        %v384 = vld [vmem:[%s3 + $0x14] sm:$0xf]
        %v385 = vld [vmem:[%s3 + $0x18] sm:$0xf]
        %v386 = vld [vmem:[%s3 + $0x1c] sm:$0xf]
        %v387 = vld [vmem:[%s4] sm:$0x1]
        %v388 = vrot.slane %v368, 7
        %v389 = vrot.slane %v373, 7
        %vm390 = vcmp.lt.s32.totalorder %v377, 1
        %v391 = vsel %vm390, %v388, %v389
        %v392 = vsel %vm390, %v389, %v388
        %vm393 = vcmp.ge.s32.totalorder %v377, 1
        %vm394 = vcmp.ge.s32.totalorder %v378, 1
        %v395 = vsel %vm393, %v392, 0.0
        %v396 = vsel %vm394, %v391, 0.0
        %399 = vrot.lane.b32.xlu0 %v368, 32
        %v400 = vpop.permute.xlu0 %399
        %401 = vrot.lane.b32.xlu0 %v373, 32
        %v402 = vpop.permute.xlu0 %401
        %vm405 = vcmask 261120
        %v406 = vsel %vm405, %v395, %v400
        %v407 = vsel %vm405, %v396, %v402
        %v408 = vunpack.c.l.bf16 %v379
        %v409 = vunpack.c.l.bf16 %v380
        %v410 = vunpack.c.l.bf16 %v381
        %v411 = vunpack.c.l.bf16 %v382
        %v412 = vunpack.c.l.bf16 %v383
        %v413 = vunpack.c.l.bf16 %v384
        %v414 = vunpack.c.l.bf16 %v385
        %v415 = vunpack.c.l.bf16 %v386
        %v417 = vlaneseq
        %v418 = vshrl.u32 %v417, 7
        %v419 = vsub.s32 0, %v418
        %v420 = vrot.slane %v387, %v419
        %vm422 = vcmask 523264
        %v424 = vsel %vm422, %v406, 0
        %v427 = vsel %vm422, %v407, 0
        %429 = vmatprep.subr.mxu0 0.0
        %430 = vmatpush1.msra.mxu0 0.0
        %431 = vmatprep.subr.mxu0 0.0
        %432 = vmatpush1.msra.mxu0 0.0
        %433 = vmatprep.subr.mxu0 0.0
        %434 = vmatpush1.msra.mxu0 0.0
        %435 = vmatprep.subr.mxu0 0.0
        %436 = vmatpush1.msra.mxu0 0.0
        %437 = vmatprep.subr.mxu0 0.0
        %438 = vmatpush1.msra.mxu0 0.0
        %439 = vmatprep.subr.mxu0 0.0
        %440 = vmatpush1.msra.mxu0 0.0
        %441 = vmatprep.subr.mxu0 0.0
        %442 = vmatpush1.msra.mxu0 0.0
        %443 = vmatprep.subr.mxu0 0.0
        %444 = vmatpush1.msra.mxu0 0.0
        %445 = vmatprep.subr.mxu0 0.0
        %446 = vmatpush1.msra.mxu0 %v415
        %447 = vmatprep.subr.mxu0 0.0
        %448 = vmatpush1.msra.mxu0 %v414
        %449 = vmatprep.subr.mxu0 0.0
        %450 = vmatpush1.msra.mxu0 %v413
        %451 = vmatprep.subr.mxu0 0.0
        %452 = vmatpush1.msra.mxu0 %v412
        %453 = vmatprep.subr.mxu0 0.0
        %454 = vmatpush1.msra.mxu0 %v411
        %455 = vmatprep.subr.mxu0 0.0
        %456 = vmatpush1.msra.mxu0 %v410
        %457 = vmatprep.subr.mxu0 0.0
        %458 = vmatpush1.msra.mxu0 %v409
        %459 = vmatprep.subr.mxu0 0.0
        %460 = vmatpush1.msra.mxu0 %v408
        %461 = vmatprep.subr.mxu0 0.0
        %462 = vmatpush2.msra.mxu0 0.0
        %463 = vmatprep.subr.mxu0 0.0
        %464 = vmatpush2.msra.mxu0 0.0
        %465 = vmatprep.subr.mxu0 0.0
        %466 = vmatpush2.msra.mxu0 0.0
        %467 = vmatprep.subr.mxu0 0.0
        %468 = vmatpush2.msra.mxu0 0.0
        %469 = vmatprep.subr.mxu0 0.0
        %470 = vmatpush2.msra.mxu0 0.0
        %471 = vmatprep.subr.mxu0 0.0
        %472 = vmatpush2.msra.mxu0 0.0
        %473 = vmatprep.subr.mxu0 0.0
        %474 = vmatpush2.msra.mxu0 0.0
        %475 = vmatprep.subr.mxu0 0.0
        %476 = vmatpush2.msra.mxu0 0.0
        %477 = vmatprep.subr.mxu0 0.0
        %478 = vmatpush2.msra.mxu0 0.0
        %479 = vmatprep.subr.mxu0 0.0
        %480 = vmatpush2.msra.mxu0 0.0
        %481 = vmatprep.subr.mxu0 0.0
        %482 = vmatpush2.msra.mxu0 0.0
        %483 = vmatprep.subr.mxu0 0.0
        %484 = vmatpush2.msra.mxu0 0.0
        %485 = vmatprep.subr.mxu0 0.0
        %486 = vmatpush2.msra.mxu0 0.0
        %487 = vmatprep.subr.mxu0 0.0
        %488 = vmatpush2.msra.mxu0 0.0
        %489 = vmatprep.subr.mxu0 0.0
        %490 = vmatpush2.msra.mxu0 0.0
        %491 = vmatprep.subr.mxu0 0.0
        %492 = vmatpush2.msra.mxu0 0.0
        %493 = vmatprep.mubr.f32.mxu0 0.0
        %494 = vmatmul.mubr.f32.gmra.mxu0 %v424
        %v495 = vpop.f32.mrf.mxu0
        %v496 = vadd.f32 %v420, %v495
        %v497 = vpop.f32.mrf.mxu0
        %498 = vmatprep.mubr.f32.mxu0 0.0
        %499 = vmatmul.mubr.f32.gmra.mxu0 %v427
        %v500 = vpop.f32.mrf.mxu0
        %v501 = vadd.f32 %v420, %v500
        %v502 = vpop.f32.mrf.mxu0
        %503 = vdwg.mxu0
        %v504 = vmax.f32 %v496, 0.0
        %v505 = vmax.f32 %v501, 0.0
        %s506 = scalar_lea.vmem %s3, 32
        %v507 = vld [vmem:[%s506] sm:$0xf]
        %v508 = vld [vmem:[%s506 + $0x4] sm:$0xf]
        %v509 = vld [vmem:[%s506 + $0x8] sm:$0xf]
        %v510 = vld [vmem:[%s506 + $0xc] sm:$0xf]
        %v511 = vld [vmem:[%s506 + $0x10] sm:$0xf]
        %v512 = vld [vmem:[%s506 + $0x14] sm:$0xf]
        %v513 = vld [vmem:[%s506 + $0x18] sm:$0xf]
        %v514 = vld [vmem:[%s506 + $0x1c] sm:$0xf]
        %s515 = scalar_lea.vmem %s4, 1
        %v516 = vld [vmem:[%s515] sm:$0x1]
        %v517 = vrot.slane %v504, 7
        %v518 = vrot.slane %v505, 7
        %v519 = vsel %vm390, %v517, %v518
        %v520 = vsel %vm390, %v518, %v517
        %v521 = vsel %vm393, %v520, 0.0
        %v522 = vsel %vm394, %v519, 0.0
        %525 = vrot.lane.b32.xlu0 %v504, 32
        %v526 = vpop.permute.xlu0 %525
        %527 = vrot.lane.b32.xlu0 %v505, 32
        %v528 = vpop.permute.xlu0 %527
        %v531 = vsel %vm405, %v521, %v526
        %v532 = vsel %vm405, %v522, %v528
        %v533 = vunpack.c.l.bf16 %v507
        %v534 = vunpack.c.l.bf16 %v508
        %v535 = vunpack.c.l.bf16 %v509
        %v536 = vunpack.c.l.bf16 %v510
        %v537 = vunpack.c.l.bf16 %v511
        %v538 = vunpack.c.l.bf16 %v512
        %v539 = vunpack.c.l.bf16 %v513
        %v540 = vunpack.c.l.bf16 %v514
        %v542 = vlaneseq
        %v543 = vshrl.u32 %v542, 7
        %v544 = vsub.s32 0, %v543
        %v545 = vrot.slane %v516, %v544
        %v548 = vsel %vm422, %v531, 0
        %v551 = vsel %vm422, %v532, 0
        %553 = vmatprep.subr.mxu0 0.0
        %554 = vmatpush1.msra.mxu0 0.0
        %555 = vmatprep.subr.mxu0 0.0
        %556 = vmatpush1.msra.mxu0 0.0
        %557 = vmatprep.subr.mxu0 0.0
        %558 = vmatpush1.msra.mxu0 0.0
        %559 = vmatprep.subr.mxu0 0.0
        %560 = vmatpush1.msra.mxu0 0.0
        %561 = vmatprep.subr.mxu0 0.0
        %562 = vmatpush1.msra.mxu0 0.0
        %563 = vmatprep.subr.mxu0 0.0
        %564 = vmatpush1.msra.mxu0 0.0
        %565 = vmatprep.subr.mxu0 0.0
        %566 = vmatpush1.msra.mxu0 0.0
        %567 = vmatprep.subr.mxu0 0.0
        %568 = vmatpush1.msra.mxu0 0.0
        %569 = vmatprep.subr.mxu0 0.0
        %570 = vmatpush1.msra.mxu0 %v540
        %571 = vmatprep.subr.mxu0 0.0
        %572 = vmatpush1.msra.mxu0 %v539
        %573 = vmatprep.subr.mxu0 0.0
        %574 = vmatpush1.msra.mxu0 %v538
        %575 = vmatprep.subr.mxu0 0.0
        %576 = vmatpush1.msra.mxu0 %v537
        %577 = vmatprep.subr.mxu0 0.0
        %578 = vmatpush1.msra.mxu0 %v536
        %579 = vmatprep.subr.mxu0 0.0
        %580 = vmatpush1.msra.mxu0 %v535
        %581 = vmatprep.subr.mxu0 0.0
        %582 = vmatpush1.msra.mxu0 %v534
        %583 = vmatprep.subr.mxu0 0.0
        %584 = vmatpush1.msra.mxu0 %v533
        %585 = vmatprep.subr.mxu0 0.0
        %586 = vmatpush2.msra.mxu0 0.0
        %587 = vmatprep.subr.mxu0 0.0
        %588 = vmatpush2.msra.mxu0 0.0
        %589 = vmatprep.subr.mxu0 0.0
        %590 = vmatpush2.msra.mxu0 0.0
        %591 = vmatprep.subr.mxu0 0.0
        %592 = vmatpush2.msra.mxu0 0.0
        %593 = vmatprep.subr.mxu0 0.0
        %594 = vmatpush2.msra.mxu0 0.0
        %595 = vmatprep.subr.mxu0 0.0
        %596 = vmatpush2.msra.mxu0 0.0
        %597 = vmatprep.subr.mxu0 0.0
        %598 = vmatpush2.msra.mxu0 0.0
        %599 = vmatprep.subr.mxu0 0.0
        %600 = vmatpush2.msra.mxu0 0.0
        %601 = vmatprep.subr.mxu0 0.0
        %602 = vmatpush2.msra.mxu0 0.0
        %603 = vmatprep.subr.mxu0 0.0
        %604 = vmatpush2.msra.mxu0 0.0
        %605 = vmatprep.subr.mxu0 0.0
        %606 = vmatpush2.msra.mxu0 0.0
        %607 = vmatprep.subr.mxu0 0.0
        %608 = vmatpush2.msra.mxu0 0.0
        %609 = vmatprep.subr.mxu0 0.0
        %610 = vmatpush2.msra.mxu0 0.0
        %611 = vmatprep.subr.mxu0 0.0
        %612 = vmatpush2.msra.mxu0 0.0
        %613 = vmatprep.subr.mxu0 0.0
        %614 = vmatpush2.msra.mxu0 0.0
        %615 = vmatprep.subr.mxu0 0.0
        %616 = vmatpush2.msra.mxu0 0.0
        %617 = vmatprep.mubr.f32.mxu0 0.0
        %618 = vmatmul.mubr.f32.gmra.mxu0 %v548
        %v619 = vpop.f32.mrf.mxu0
        %v620 = vadd.f32 %v545, %v619
        %v621 = vpop.f32.mrf.mxu0
        %622 = vmatprep.mubr.f32.mxu0 0.0
        %623 = vmatmul.mubr.f32.gmra.mxu0 %v551
        %v624 = vpop.f32.mrf.mxu0
        %v625 = vadd.f32 %v545, %v624
        %v626 = vpop.f32.mrf.mxu0
        %627 = vdwg.mxu0
        %v628 = vmax.f32 %v620, 0.0
        %v629 = vmax.f32 %v625, 0.0
        %v630 = vadd.f32 %v628, %v368
        %v631 = vadd.f32 %v629, %v373
        %v632 = vmax.f32 %v630, 0.0
        %v633 = vmax.f32 %v631, 0.0
        %s634 = scalar_lea.vmem %s3, 64
        %v635 = vld [vmem:[%s634] sm:$0xf]
        %v636 = vld [vmem:[%s634 + $0x4] sm:$0xf]
        %v637 = vld [vmem:[%s634 + $0x8] sm:$0xf]
        %v638 = vld [vmem:[%s634 + $0xc] sm:$0xf]
        %v639 = vld [vmem:[%s634 + $0x10] sm:$0xf]
        %v640 = vld [vmem:[%s634 + $0x14] sm:$0xf]
        %v641 = vld [vmem:[%s634 + $0x18] sm:$0xf]
        %v642 = vld [vmem:[%s634 + $0x1c] sm:$0xf]
        %s643 = scalar_lea.vmem %s4, 2
        %v644 = vld [vmem:[%s643] sm:$0x1]
        %v645 = vrot.slane %v632, 6
        %v646 = vrot.slane %v633, 6
        %vm647 = vcmp.lt.s32.totalorder %v377, 2
        %v648 = vsel %vm647, %v645, %v646
        %v649 = vsel %vm647, %v646, %v645
        %vm650 = vcmp.ge.s32.totalorder %v377, 2
        %vm651 = vcmp.ge.s32.totalorder %v378, 2
        %v652 = vsel %vm650, %v649, 0.0
        %v653 = vsel %vm651, %v648, 0.0
        %656 = vrot.lane.b32.xlu0 %v632, 32
        %v657 = vpop.permute.xlu0 %656
        %658 = vrot.lane.b32.xlu0 %v633, 32
        %v659 = vpop.permute.xlu0 %658
        %v662 = vsel %vm405, %v652, %v657
        %v663 = vsel %vm405, %v653, %v659
        %v664 = vunpack.c.l.bf16 %v635
        %v665 = vunpack.c.l.bf16 %v636
        %v666 = vunpack.c.l.bf16 %v637
        %v667 = vunpack.c.l.bf16 %v638
        %v668 = vunpack.c.l.bf16 %v639
        %v669 = vunpack.c.l.bf16 %v640
        %v670 = vunpack.c.l.bf16 %v641
        %v671 = vunpack.c.l.bf16 %v642
        %v673 = vlaneseq
        %v674 = vshrl.u32 %v673, 7
        %v675 = vsub.s32 0, %v674
        %v676 = vrot.slane %v644, %v675
        %v679 = vsel %vm422, %v662, 0
        %v682 = vsel %vm422, %v663, 0
        %684 = vmatprep.subr.mxu0 0.0
        %685 = vmatpush1.msra.mxu0 0.0
        %686 = vmatprep.subr.mxu0 0.0
        %687 = vmatpush1.msra.mxu0 0.0
        %688 = vmatprep.subr.mxu0 0.0
        %689 = vmatpush1.msra.mxu0 0.0
        %690 = vmatprep.subr.mxu0 0.0
        %691 = vmatpush1.msra.mxu0 0.0
        %692 = vmatprep.subr.mxu0 0.0
        %693 = vmatpush1.msra.mxu0 0.0
        %694 = vmatprep.subr.mxu0 0.0
        %695 = vmatpush1.msra.mxu0 0.0
        %696 = vmatprep.subr.mxu0 0.0
        %697 = vmatpush1.msra.mxu0 0.0
        %698 = vmatprep.subr.mxu0 0.0
        %699 = vmatpush1.msra.mxu0 0.0
        %700 = vmatprep.subr.mxu0 0.0
        %701 = vmatpush1.msra.mxu0 %v671
        %702 = vmatprep.subr.mxu0 0.0
        %703 = vmatpush1.msra.mxu0 %v670
        %704 = vmatprep.subr.mxu0 0.0
        %705 = vmatpush1.msra.mxu0 %v669
        %706 = vmatprep.subr.mxu0 0.0
        %707 = vmatpush1.msra.mxu0 %v668
        %708 = vmatprep.subr.mxu0 0.0
        %709 = vmatpush1.msra.mxu0 %v667
        %710 = vmatprep.subr.mxu0 0.0
        %711 = vmatpush1.msra.mxu0 %v666
        %712 = vmatprep.subr.mxu0 0.0
        %713 = vmatpush1.msra.mxu0 %v665
        %714 = vmatprep.subr.mxu0 0.0
        %715 = vmatpush1.msra.mxu0 %v664
        %716 = vmatprep.subr.mxu0 0.0
        %717 = vmatpush2.msra.mxu0 0.0
        %718 = vmatprep.subr.mxu0 0.0
        %719 = vmatpush2.msra.mxu0 0.0
        %720 = vmatprep.subr.mxu0 0.0
        %721 = vmatpush2.msra.mxu0 0.0
        %722 = vmatprep.subr.mxu0 0.0
        %723 = vmatpush2.msra.mxu0 0.0
        %724 = vmatprep.subr.mxu0 0.0
        %725 = vmatpush2.msra.mxu0 0.0
        %726 = vmatprep.subr.mxu0 0.0
        %727 = vmatpush2.msra.mxu0 0.0
        %728 = vmatprep.subr.mxu0 0.0
        %729 = vmatpush2.msra.mxu0 0.0
        %730 = vmatprep.subr.mxu0 0.0
        %731 = vmatpush2.msra.mxu0 0.0
        %732 = vmatprep.subr.mxu0 0.0
        %733 = vmatpush2.msra.mxu0 0.0
        %734 = vmatprep.subr.mxu0 0.0
        %735 = vmatpush2.msra.mxu0 0.0
        %736 = vmatprep.subr.mxu0 0.0
        %737 = vmatpush2.msra.mxu0 0.0
        %738 = vmatprep.subr.mxu0 0.0
        %739 = vmatpush2.msra.mxu0 0.0
        %740 = vmatprep.subr.mxu0 0.0
        %741 = vmatpush2.msra.mxu0 0.0
        %742 = vmatprep.subr.mxu0 0.0
        %743 = vmatpush2.msra.mxu0 0.0
        %744 = vmatprep.subr.mxu0 0.0
        %745 = vmatpush2.msra.mxu0 0.0
        %746 = vmatprep.subr.mxu0 0.0
        %747 = vmatpush2.msra.mxu0 0.0
        %748 = vmatprep.mubr.f32.mxu0 0.0
        %749 = vmatmul.mubr.f32.gmra.mxu0 %v679
        %v750 = vpop.f32.mrf.mxu0
        %v751 = vadd.f32 %v676, %v750
        %v752 = vpop.f32.mrf.mxu0
        %753 = vmatprep.mubr.f32.mxu0 0.0
        %754 = vmatmul.mubr.f32.gmra.mxu0 %v682
        %v755 = vpop.f32.mrf.mxu0
        %v756 = vadd.f32 %v676, %v755
        %v757 = vpop.f32.mrf.mxu0
        %758 = vdwg.mxu0
        %v759 = vmax.f32 %v751, 0.0
        %v760 = vmax.f32 %v756, 0.0
        %s761 = scalar_lea.vmem %s3, 96
        %v762 = vld [vmem:[%s761] sm:$0xf]
        %v763 = vld [vmem:[%s761 + $0x4] sm:$0xf]
        %v764 = vld [vmem:[%s761 + $0x8] sm:$0xf]
        %v765 = vld [vmem:[%s761 + $0xc] sm:$0xf]
        %v766 = vld [vmem:[%s761 + $0x10] sm:$0xf]
        %v767 = vld [vmem:[%s761 + $0x14] sm:$0xf]
        %v768 = vld [vmem:[%s761 + $0x18] sm:$0xf]
        %v769 = vld [vmem:[%s761 + $0x1c] sm:$0xf]
        %s770 = scalar_lea.vmem %s4, 3
        %v771 = vld [vmem:[%s770] sm:$0x1]
        %v772 = vrot.slane %v759, 6
        %v773 = vrot.slane %v760, 6
        %v774 = vsel %vm647, %v772, %v773
        %v775 = vsel %vm647, %v773, %v772
        %v776 = vsel %vm650, %v775, 0.0
        %v777 = vsel %vm651, %v774, 0.0
        %780 = vrot.lane.b32.xlu0 %v759, 32
        %v781 = vpop.permute.xlu0 %780
        %782 = vrot.lane.b32.xlu0 %v760, 32
        %v783 = vpop.permute.xlu0 %782
        %v786 = vsel %vm405, %v776, %v781
        %v787 = vsel %vm405, %v777, %v783
        %v788 = vunpack.c.l.bf16 %v762
        %v789 = vunpack.c.l.bf16 %v763
        %v790 = vunpack.c.l.bf16 %v764
        %v791 = vunpack.c.l.bf16 %v765
        %v792 = vunpack.c.l.bf16 %v766
        %v793 = vunpack.c.l.bf16 %v767
        %v794 = vunpack.c.l.bf16 %v768
        %v795 = vunpack.c.l.bf16 %v769
        %v797 = vlaneseq
        %v798 = vshrl.u32 %v797, 7
        %v799 = vsub.s32 0, %v798
        %v800 = vrot.slane %v771, %v799
        %v803 = vsel %vm422, %v786, 0
        %v806 = vsel %vm422, %v787, 0
        %808 = vmatprep.subr.mxu0 0.0
        %809 = vmatpush1.msra.mxu0 0.0
        %810 = vmatprep.subr.mxu0 0.0
        %811 = vmatpush1.msra.mxu0 0.0
        %812 = vmatprep.subr.mxu0 0.0
        %813 = vmatpush1.msra.mxu0 0.0
        %814 = vmatprep.subr.mxu0 0.0
        %815 = vmatpush1.msra.mxu0 0.0
        %816 = vmatprep.subr.mxu0 0.0
        %817 = vmatpush1.msra.mxu0 0.0
        %818 = vmatprep.subr.mxu0 0.0
        %819 = vmatpush1.msra.mxu0 0.0
        %820 = vmatprep.subr.mxu0 0.0
        %821 = vmatpush1.msra.mxu0 0.0
        %822 = vmatprep.subr.mxu0 0.0
        %823 = vmatpush1.msra.mxu0 0.0
        %824 = vmatprep.subr.mxu0 0.0
        %825 = vmatpush1.msra.mxu0 %v795
        %826 = vmatprep.subr.mxu0 0.0
        %827 = vmatpush1.msra.mxu0 %v794
        %828 = vmatprep.subr.mxu0 0.0
        %829 = vmatpush1.msra.mxu0 %v793
        %830 = vmatprep.subr.mxu0 0.0
        %831 = vmatpush1.msra.mxu0 %v792
        %832 = vmatprep.subr.mxu0 0.0
        %833 = vmatpush1.msra.mxu0 %v791
        %834 = vmatprep.subr.mxu0 0.0
        %835 = vmatpush1.msra.mxu0 %v790
        %836 = vmatprep.subr.mxu0 0.0
        %837 = vmatpush1.msra.mxu0 %v789
        %838 = vmatprep.subr.mxu0 0.0
        %839 = vmatpush1.msra.mxu0 %v788
        %840 = vmatprep.subr.mxu0 0.0
        %841 = vmatpush2.msra.mxu0 0.0
        %842 = vmatprep.subr.mxu0 0.0
        %843 = vmatpush2.msra.mxu0 0.0
        %844 = vmatprep.subr.mxu0 0.0
        %845 = vmatpush2.msra.mxu0 0.0
        %846 = vmatprep.subr.mxu0 0.0
        %847 = vmatpush2.msra.mxu0 0.0
        %848 = vmatprep.subr.mxu0 0.0
        %849 = vmatpush2.msra.mxu0 0.0
        %850 = vmatprep.subr.mxu0 0.0
        %851 = vmatpush2.msra.mxu0 0.0
        %852 = vmatprep.subr.mxu0 0.0
        %853 = vmatpush2.msra.mxu0 0.0
        %854 = vmatprep.subr.mxu0 0.0
        %855 = vmatpush2.msra.mxu0 0.0
        %856 = vmatprep.subr.mxu0 0.0
        %857 = vmatpush2.msra.mxu0 0.0
        %858 = vmatprep.subr.mxu0 0.0
        %859 = vmatpush2.msra.mxu0 0.0
        %860 = vmatprep.subr.mxu0 0.0
        %861 = vmatpush2.msra.mxu0 0.0
        %862 = vmatprep.subr.mxu0 0.0
        %863 = vmatpush2.msra.mxu0 0.0
        %864 = vmatprep.subr.mxu0 0.0
        %865 = vmatpush2.msra.mxu0 0.0
        %866 = vmatprep.subr.mxu0 0.0
        %867 = vmatpush2.msra.mxu0 0.0
        %868 = vmatprep.subr.mxu0 0.0
        %869 = vmatpush2.msra.mxu0 0.0
        %870 = vmatprep.subr.mxu0 0.0
        %871 = vmatpush2.msra.mxu0 0.0
        %872 = vmatprep.mubr.f32.mxu0 0.0
        %873 = vmatmul.mubr.f32.gmra.mxu0 %v803
        %v874 = vpop.f32.mrf.mxu0
        %v875 = vadd.f32 %v800, %v874
        %v876 = vpop.f32.mrf.mxu0
        %877 = vmatprep.mubr.f32.mxu0 0.0
        %878 = vmatmul.mubr.f32.gmra.mxu0 %v806
        %v879 = vpop.f32.mrf.mxu0
        %v880 = vadd.f32 %v800, %v879
        %v881 = vpop.f32.mrf.mxu0
        %882 = vdwg.mxu0
        %v883 = vmax.f32 %v875, 0.0
        %v884 = vmax.f32 %v880, 0.0
        %v885 = vadd.f32 %v883, %v632
        %v886 = vadd.f32 %v884, %v633
        %v887 = vmax.f32 %v885, 0.0
        %v888 = vmax.f32 %v886, 0.0
        %v889 = vld [vmem:[%s5] sm:$0xf]
        %v890 = vld [vmem:[%s5 + $0x4] sm:$0xf]
        %v891 = vld [vmem:[%s5 + $0x8] sm:$0xf]
        %v892 = vld [vmem:[%s5 + $0xc] sm:$0xf]
        %v893 = vunpack.c.l.bf16 %v889
        %v894 = vunpack.c.l.bf16 %v890
        %v895 = vunpack.c.l.bf16 %v891
        %v896 = vunpack.c.l.bf16 %v892
        %v897 = vld [vmem:[%s6] sm:$0x1]
        %v899 = vlaneseq
        %v900 = vshrl.u32 %v899, 7
        %v901 = vsub.s32 0, %v900
        %v902 = vrot.slane %v897, %v901
        %v905 = vsel %vm405, %v887, 0
        %v908 = vsel %vm405, %v888, 0
        %910 = vmatprep.subr.mxu0 0.0
        %911 = vmatpush1.msra.mxu0 0.0
        %912 = vmatprep.subr.mxu0 0.0
        %913 = vmatpush1.msra.mxu0 0.0
        %914 = vmatprep.subr.mxu0 0.0
        %915 = vmatpush1.msra.mxu0 0.0
        %916 = vmatprep.subr.mxu0 0.0
        %917 = vmatpush1.msra.mxu0 0.0
        %918 = vmatprep.subr.mxu0 0.0
        %919 = vmatpush1.msra.mxu0 0.0
        %920 = vmatprep.subr.mxu0 0.0
        %921 = vmatpush1.msra.mxu0 0.0
        %922 = vmatprep.subr.mxu0 0.0
        %923 = vmatpush1.msra.mxu0 0.0
        %924 = vmatprep.subr.mxu0 0.0
        %925 = vmatpush1.msra.mxu0 0.0
        %926 = vmatprep.subr.mxu0 0.0
        %927 = vmatpush1.msra.mxu0 0.0
        %928 = vmatprep.subr.mxu0 0.0
        %929 = vmatpush1.msra.mxu0 0.0
        %930 = vmatprep.subr.mxu0 0.0
        %931 = vmatpush1.msra.mxu0 0.0
        %932 = vmatprep.subr.mxu0 0.0
        %933 = vmatpush1.msra.mxu0 0.0
        %934 = vmatprep.subr.mxu0 0.0
        %935 = vmatpush1.msra.mxu0 %v896
        %936 = vmatprep.subr.mxu0 0.0
        %937 = vmatpush1.msra.mxu0 %v895
        %938 = vmatprep.subr.mxu0 0.0
        %939 = vmatpush1.msra.mxu0 %v894
        %940 = vmatprep.subr.mxu0 0.0
        %941 = vmatpush1.msra.mxu0 %v893
        %942 = vmatprep.subr.mxu0 0.0
        %943 = vmatpush2.msra.mxu0 0.0
        %944 = vmatprep.subr.mxu0 0.0
        %945 = vmatpush2.msra.mxu0 0.0
        %946 = vmatprep.subr.mxu0 0.0
        %947 = vmatpush2.msra.mxu0 0.0
        %948 = vmatprep.subr.mxu0 0.0
        %949 = vmatpush2.msra.mxu0 0.0
        %950 = vmatprep.subr.mxu0 0.0
        %951 = vmatpush2.msra.mxu0 0.0
        %952 = vmatprep.subr.mxu0 0.0
        %953 = vmatpush2.msra.mxu0 0.0
        %954 = vmatprep.subr.mxu0 0.0
        %955 = vmatpush2.msra.mxu0 0.0
        %956 = vmatprep.subr.mxu0 0.0
        %957 = vmatpush2.msra.mxu0 0.0
        %958 = vmatprep.subr.mxu0 0.0
        %959 = vmatpush2.msra.mxu0 0.0
        %960 = vmatprep.subr.mxu0 0.0
        %961 = vmatpush2.msra.mxu0 0.0
        %962 = vmatprep.subr.mxu0 0.0
        %963 = vmatpush2.msra.mxu0 0.0
        %964 = vmatprep.subr.mxu0 0.0
        %965 = vmatpush2.msra.mxu0 0.0
        %966 = vmatprep.subr.mxu0 0.0
        %967 = vmatpush2.msra.mxu0 0.0
        %968 = vmatprep.subr.mxu0 0.0
        %969 = vmatpush2.msra.mxu0 0.0
        %970 = vmatprep.subr.mxu0 0.0
        %971 = vmatpush2.msra.mxu0 0.0
        %972 = vmatprep.subr.mxu0 0.0
        %973 = vmatpush2.msra.mxu0 0.0
        %974 = vmatprep.mubr.f32.mxu0 0.0
        %975 = vmatmul.mubr.f32.gmra.mxu0 %v905
        %v976 = vpop.f32.mrf.mxu0
        %v977 = vadd.f32 %v902, %v976
        %v978 = vpop.f32.mrf.mxu0
        %979 = vmatprep.mubr.f32.mxu0 0.0
        %980 = vmatmul.mubr.f32.gmra.mxu0 %v908
        %v981 = vpop.f32.mrf.mxu0
        %v982 = vadd.f32 %v902, %v981
        %v983 = vpop.f32.mrf.mxu0
        %984 = vdwg.mxu0
        %985 = vst [vmem:[%s271] sm:$0xff] %v977
        %986 = vst [vmem:[%s271 + $0x8] sm:$0xff] %v982
        %s987 = sand.u32 %s181, 1
        %s988 = scalar_lea.sflag [#allocation3], %s987
        %s989 = sand.u32 %s181, 1
        %s990 = smul.addr %s989, 16
        %s991 = scalar_lea.vmem [#allocation2], %s990
        // Predicated region
        $region49: #{tpu_custom_call.1} parent=47 // pred_check
          %p992 = pneg %p191
        $region50: #{tpu_custom_call.1} parent=47 // pred_check_branch
          %994 = sbr.rel (%p992) target = $region52
        $region51: #{tpu_custom_call.1} parent=47 // pred_region
          %s996 = ssub.s32 256, 256
          %997 = vsyncadd %s988, %s996
          %s998 = smul.addr %s21, 2
          %s999 = smul.addr %s998, 128
          %s1000 = scalar_lea.hbm %s7, %s999
          %s1001 = sshll.u32 %s991, 4
          %s1002 = int_to_ptr.vmem [resolvable:$true] %s1001
          %1007 = dma.vmem_to_hbm [thread:$0]  %s1002, 256, %s1000, %s988, 128, 128, 8
        $region52: #{tpu_custom_call.1} parent=47 // pred_fallthru
          _
      $region48: #{tpu_custom_call.1} parent=5 // pred_fallthru
        _
      %p1008 = scmp.le.s32.totalorder 2, %s16
      // Predicated region
      $region53: #{tpu_custom_call.1} parent=5 // pred_check
        %p1009 = pneg %p1008
      $region54: #{tpu_custom_call.1} parent=5 // pred_check_branch
        %1011 = sbr.rel (%p1009) target = $region56
      $region55: #{tpu_custom_call.1} parent=5 // pred_region
        %s1012 = ssub.s32 %s16, 2
        // Predicated region
        $region57: #{tpu_custom_call.1} parent=55 // pred_check
          %p1013 = pneg %p197
        $region58: #{tpu_custom_call.1} parent=55 // pred_check_branch
          %1015 = sbr.rel (%p1013) target = $region60
        $region59: #{tpu_custom_call.1} parent=55 // pred_region
          %s1016 = sand.u32 %s182, 1
          %s1017 = scalar_lea.sflag [#allocation3], %s1016
          %s1018 = sand.u32 %s182, 1
          %s1019 = smul.addr %s1018, 16
          %s1020 = scalar_lea.vmem [#allocation2], %s1019
          %1021 = dma.done %s1017, 256
        $region60: #{tpu_custom_call.1} parent=55 // pred_fallthru
          _
      $region56: #{tpu_custom_call.1} parent=5 // pred_fallthru
        _
    $region6: #{tpu_custom_call.1} parent=1 // loop_footer
      %s20 = sadd.s32 1, %s16
    $region7: #{tpu_custom_call.1} parent=1 // loop_footer_branch
      %15 = sbr.rel target = $region3
    $region8: #{tpu_custom_call.1} parent=1 // loop_exit
      _
    %1022 = vsyncpa [#allocation3], 1
    %s1023 = scalar_lea.sflag [#allocation3], 1
    %1024 = vsyncpa %s1023, 1

</llo_original>
